<compile_context>
chip_gen: v6e
topology: v6e:2x2x1
jax: 0.10.0
libtpu: 0.0.40
codegen_flags: <defaults>
</compile_context>

<pallas_src>
import jax
import jax.numpy as jnp
import numpy as np
from jax.experimental import pallas as pl
from jax.experimental.pallas import tpu as pltpu

# Small shapes consistent with the module's forward.
B = 2               # batch
C_IN = 4            # cfg.in_channels
H = W = 16          # spatial dims of the mel-spectrogram input
HW = H * W
BHW = B * HW        # 512
FEAT = 32           # backbone_out / self.feat_dim
HIDDEN = 512        # fixed by nn.Linear(backbone_out, 512)
NUM_CLASSES = 10    # num_classes
BN_EPS = 1e-5

M_PAD = 8           # classifier rows padded to one sublane tile
OUT_PAD = 128       # logits padded to one lane tile
K_STEM = 8          # stem contraction: C_IN channels + 1 bias row + zero pad -> sublane tile
CST_ROWS = 40       # FEAT rows of wconv_aug + b1 row + b2 row, rounded up to a multiple of 8
CST_W = HIDDEN      # 512-lane constant slab (holds b1; wconv/b2 occupy leading lanes)


def birdclef_kernel(x_ref, cst_ref, wcls_ref, out_ref):
    # x_ref    : [K_STEM, BHW]          f32  rows 0..C_IN-1 = x^T, row C_IN = ones, rest 0
    # cst_ref  : [CST_ROWS, CST_W]      f32  rows 0..FEAT-1 lanes 0..K_STEM-1 = wconv_aug,
    #                                        row FEAT = b1 (BN1d folded), row FEAT+1 = b2 pad
    # wcls_ref : [FEAT+OUT_PAD, HIDDEN] bf16 rows 0..FEAT-1 = w1_f, rows FEAT.. = w2^T padded
    # out_ref  : [M_PAD, OUT_PAD]       f32
    cst = cst_ref[...]

    # ---- stand-in backbone stem: 1x1 conv (BN2d scale+bias folded) + ReLU, lane-dense.
    # TODO(synk): the real timm backbone (depthwise convs, SE blocks, ...) is not reproduced.
    feat = jnp.dot(cst[0:FEAT, 0:K_STEM], x_ref[...],
                   preferred_element_type=jnp.float32)              # [FEAT, BHW]
    feat = jnp.maximum(feat, 0.0)

    # ---- AdaptiveAvgPool2d(1): MXU contraction against an in-register batch-indicator
    # matrix (1/HW folded into w1).  Pooled rows >= B stay zero and are sliced away later.
    row_ids = jax.lax.broadcasted_iota(jnp.int32, (M_PAD, BHW), 0)
    col_ids = jax.lax.broadcasted_iota(jnp.int32, (M_PAD, BHW), 1)
    lo = row_ids * HW
    pool = jnp.where((col_ids >= lo) & (col_ids < lo + HW), 1.0, 0.0)   # [M_PAD, BHW] f32
    pooled = jax.lax.dot_general(pool, feat, (((1,), (1,)), ((), ())),
                                 preferred_element_type=jnp.float32)    # [M_PAD, FEAT]

    # ---- classifier: Linear(+folded BN1d) -> ReLU -> Dropout(eval=id) -> Linear
    b1 = cst[FEAT:FEAT + 1, 0:HIDDEN]                                   # [1, HIDDEN]
    b2 = cst[FEAT + 1:FEAT + 2, 0:OUT_PAD]                              # [1, OUT_PAD]
    w1 = wcls_ref[0:FEAT, :]                                            # [FEAT, HIDDEN] bf16
    w2t = wcls_ref[FEAT:FEAT + OUT_PAD, :]                              # [OUT_PAD, HIDDEN] bf16

    h = jnp.dot(pooled.astype(jnp.bfloat16), w1,
                preferred_element_type=jnp.float32) + b1                # [M_PAD, HIDDEN] f32
    h = jnp.maximum(h, 0.0)
    logits = jax.lax.dot_general(h.astype(jnp.bfloat16), w2t,
                                 (((1,), (1,)), ((), ())),
                                 preferred_element_type=jnp.float32) + b2
    out_ref[...] = logits.astype(out_ref.dtype)                         # [M_PAD, OUT_PAD]


def birdclef_forward(x_nchw, kp):
    # NCHW -> [C_IN, B*H*W] lane-dense layout, plus a ones row so the stem bias folds
    # into the contraction (glue reshapes/concat stay in plain JAX).
    x_t = jnp.transpose(x_nchw, (1, 0, 2, 3)).reshape(C_IN, BHW)
    pad = jnp.concatenate(
        [jnp.ones((1, BHW), jnp.float32),
         jnp.zeros((K_STEM - C_IN - 1, BHW), jnp.float32)], axis=0)
    x_aug = jnp.concatenate([x_t, pad], axis=0)                          # [K_STEM, BHW]

    flops = 2 * (FEAT * K_STEM * BHW + M_PAD * BHW * FEAT
                 + M_PAD * FEAT * HIDDEN + M_PAD * HIDDEN * OUT_PAD)
    bytes_accessed = (K_STEM * BHW * 4 + CST_ROWS * CST_W * 4
                      + (FEAT + OUT_PAD) * HIDDEN * 2 + M_PAD * OUT_PAD * 4)

    out = pl.pallas_call(
        birdclef_kernel,
        out_shape=jax.ShapeDtypeStruct((M_PAD, OUT_PAD), jnp.float32),
        in_specs=[pl.BlockSpec(memory_space=pltpu.MemorySpace.VMEM)] * 3,
        out_specs=pl.BlockSpec(memory_space=pltpu.MemorySpace.VMEM),
        cost_estimate=pl.CostEstimate(flops=flops, transcendentals=0,
                                      bytes_accessed=bytes_accessed),
    )(x_aug, kp["cst"], kp["wcls"])
    # Pad rows (b >= B) hold relu(b1) @ w2 + b2 by construction; they are intentionally
    # discarded here — do not reuse them.
    return out[:B, :NUM_CLASSES]


def fold_bn(gamma, beta, mean, var, eps=BN_EPS):
    scale = gamma / jnp.sqrt(var + eps)
    return scale, beta - mean * scale


def make_raw_params(key):
    ks = jax.random.split(key, 13)
    r = lambda k, shape, s=0.1: (s * jax.random.normal(k, shape)).astype(jnp.float32)
    return dict(
        # stem: 1x1 conv (no bias) followed by BN2d
        wconv=r(ks[0], (C_IN, FEAT)),
        g2=r(ks[1], (FEAT,), 1.0), bt2=r(ks[2], (FEAT,)), m2=r(ks[3], (FEAT,)),
        v2=jnp.abs(r(ks[4], (FEAT,), 1.0)) + 0.5,
        # classifier: Linear(FEAT,512) -> BN1d(512) -> ReLU -> Dropout -> Linear(512,N)
        w1=r(ks[5], (FEAT, HIDDEN)), b1=r(ks[6], (HIDDEN,)),
        g1=r(ks[7], (HIDDEN,), 1.0), bt1=r(ks[8], (HIDDEN,)), m1=r(ks[9], (HIDDEN,)),
        v1=jnp.abs(r(ks[10], (HIDDEN,), 1.0)) + 0.5,
        w2=r(ks[11], (HIDDEN, NUM_CLASSES)), b2=r(ks[12], (NUM_CLASSES,)),
    )


def fold_params(raw):
    """Fold BN scales, stem bias, 1/(H*W), and padding into three dense kernel inputs."""
    bn2s, bn2b = fold_bn(raw["g2"], raw["bt2"], raw["m2"], raw["v2"])
    bn1s, bn1b = fold_bn(raw["g1"], raw["bt1"], raw["m1"], raw["v1"])

    # stem weight, transposed + BN2d scale folded; extra column = folded BN2d bias.
    wconv_aug = jnp.zeros((FEAT, K_STEM), jnp.float32)
    wconv_aug = wconv_aug.at[:, :C_IN].set((raw["wconv"] * bn2s[None, :]).T)
    wconv_aug = wconv_aug.at[:, C_IN].set(bn2b)

    b1_f = raw["b1"] * bn1s + bn1b                                   # BN1d applied to bias

    cst = jnp.zeros((CST_ROWS, CST_W), jnp.float32)
    cst = cst.at[0:FEAT, 0:K_STEM].set(wconv_aug)
    cst = cst.at[FEAT, 0:HIDDEN].set(b1_f)
    cst = cst.at[FEAT + 1, 0:NUM_CLASSES].set(raw["b2"])

    # bf16 classifier-weight slab: [w1 (BN1d scale + mean-pool 1/HW folded) ; w2^T padded]
    w1_f = raw["w1"] * bn1s[None, :] * (1.0 / HW)                    # [FEAT, HIDDEN]
    w2t_pad = jnp.zeros((OUT_PAD, HIDDEN), jnp.float32).at[:NUM_CLASSES, :].set(raw["w2"].T)
    wcls = jnp.concatenate([w1_f, w2t_pad], axis=0).astype(jnp.bfloat16)   # [160, 512]

    return dict(cst=cst, wcls=wcls)


def reference(x_nchw, raw):
    """Unfolded f32 math, mirroring the PyTorch forward with the stand-in stem."""
    x = jnp.transpose(x_nchw, (0, 2, 3, 1)).reshape(BHW, C_IN)
    bn2s, bn2b = fold_bn(raw["g2"], raw["bt2"], raw["m2"], raw["v2"])
    bn1s, bn1b = fold_bn(raw["g1"], raw["bt1"], raw["m1"], raw["v1"])
    feat = jnp.maximum((x @ raw["wconv"]) * bn2s + bn2b, 0.0)
    pooled = jnp.mean(feat.reshape(B, HW, FEAT), axis=1)
    h = jnp.maximum((pooled @ raw["w1"] + raw["b1"]) * bn1s + bn1b, 0.0)
    return h @ raw["w2"] + raw["b2"]


if __name__ == "__main__":
    key = jax.random.PRNGKey(0)
    kx, kp = jax.random.split(key)
    x = jax.random.normal(kx, (B, C_IN, H, W), dtype=jnp.float32)   # NCHW, like PyTorch
    raw = make_raw_params(kp)
    params = fold_params(raw)

    out = jax.block_until_ready(birdclef_forward(x, params))

    ref = reference(x, raw)
    # bf16 classifier weights / MXU-operand casts -> tolerance loosened vs the pure-f32 rev.
    np.testing.assert_allclose(np.asarray(out), np.asarray(ref), rtol=1e-2, atol=1e-2)
    assert out.shape == (B, NUM_CLASSES)
    print("KERNEL_OK")
</pallas_src>

<mosaic_0001>
module attributes {stable_mosaic.version = 11 : i64} {
  func.func @birdclef_kernel(%arg0: memref<8x512xf32, #tpu.memory_space<vmem>>, %arg1: memref<40x512xf32, #tpu.memory_space<vmem>>, %arg2: memref<160x512xbf16, #tpu.memory_space<vmem>>, %arg3: memref<8x128xf32, #tpu.memory_space<vmem>>) attributes {dimension_semantics = [], scalar_prefetch = 0 : i64, scratch_operands = 0 : i64, tpu.core_type = #tpu.core_type<tc>} {
    %c0 = arith.constant 0 : index
    %c0_0 = arith.constant 0 : index
    %0 = vector.load %arg1[%c0, %c0_0] : memref<40x512xf32, #tpu.memory_space<vmem>>, vector<40x512xf32>
    %1 = vector.extract_strided_slice %0 {offsets = [0, 0], sizes = [32, 8], strides = [1, 1]} : vector<40x512xf32> to vector<32x8xf32>
    %c0_1 = arith.constant 0 : index
    %c0_2 = arith.constant 0 : index
    %2 = vector.load %arg0[%c0_1, %c0_2] : memref<8x512xf32, #tpu.memory_space<vmem>>, vector<8x512xf32>
    %cst = arith.constant dense<0.000000e+00> : vector<32x512xf32>
    %3 = tpu.matmul %1, %2, %cst {dimension_numbers = #tpu.dot_dimension_numbers<[1], [0], [0], [1], [0, 0, 1, 1], [], []>} : vector<32x8xf32>, vector<8x512xf32>, vector<32x512xf32> -> vector<32x512xf32>
    %cst_3 = arith.constant 0.000000e+00 : f32
    %4 = vector.broadcast %cst_3 : f32 to vector<32x512xf32>
    %5 = arith.maximumf %3, %4 : vector<32x512xf32>
    %6 = tpu.iota {dimensions = array<i32: 0>} : vector<8x512xi32>
    %7 = tpu.iota {dimensions = array<i32: 1>} : vector<8x512xi32>
    %c256_i32 = arith.constant 256 : i32
    %8 = vector.broadcast %c256_i32 : i32 to vector<8x512xi32>
    %9 = arith.muli %6, %8 : vector<8x512xi32>
    %10 = arith.cmpi sge, %7, %9 : vector<8x512xi32>
    %c256_i32_4 = arith.constant 256 : i32
    %11 = vector.broadcast %c256_i32_4 : i32 to vector<8x512xi32>
    %12 = arith.addi %9, %11 : vector<8x512xi32>
    %13 = arith.cmpi slt, %7, %12 : vector<8x512xi32>
    %14 = arith.andi %10, %13 : vector<8x512xi1>
    %cst_5 = arith.constant 1.000000e+00 : f32
    %cst_6 = arith.constant 0.000000e+00 : f32
    %15 = vector.broadcast %cst_5 : f32 to vector<8x512xf32>
    %16 = vector.broadcast %cst_6 : f32 to vector<8x512xf32>
    %17 = arith.select %14, %15, %16 : vector<8x512xi1>, vector<8x512xf32>
    %cst_7 = arith.constant dense<0.000000e+00> : vector<8x32xf32>
    %18 = tpu.matmul %17, %5, %cst_7 {dimension_numbers = #tpu.dot_dimension_numbers<[1], [1], [0], [0], [0, 0, 1, 0], [], []>} : vector<8x512xf32>, vector<32x512xf32>, vector<8x32xf32> -> vector<8x32xf32>
    %19 = vector.extract_strided_slice %0 {offsets = [32, 0], sizes = [1, 512], strides = [1, 1]} : vector<40x512xf32> to vector<1x512xf32>
    %20 = vector.extract_strided_slice %0 {offsets = [33, 0], sizes = [1, 128], strides = [1, 1]} : vector<40x512xf32> to vector<1x128xf32>
    %c0_8 = arith.constant 0 : index
    %c0_9 = arith.constant 0 : index
    %21 = vector.load %arg2[%c0_8, %c0_9] : memref<160x512xbf16, #tpu.memory_space<vmem>>, vector<32x512xbf16>
    %c32 = arith.constant 32 : index
    %c0_10 = arith.constant 0 : index
    %22 = vector.load %arg2[%c32, %c0_10] : memref<160x512xbf16, #tpu.memory_space<vmem>>, vector<128x512xbf16>
    %23 = arith.truncf %18 : vector<8x32xf32> to vector<8x32xbf16>
    %cst_11 = arith.constant dense<0.000000e+00> : vector<8x512xf32>
    %24 = tpu.matmul %23, %21, %cst_11 {dimension_numbers = #tpu.dot_dimension_numbers<[1], [0], [0], [1], [0, 0, 1, 1], [], []>} : vector<8x32xbf16>, vector<32x512xbf16>, vector<8x512xf32> -> vector<8x512xf32>
    %25 = vector.broadcast %19 : vector<1x512xf32> to vector<8x512xf32>
    %26 = arith.addf %24, %25 : vector<8x512xf32>
    %cst_12 = arith.constant 0.000000e+00 : f32
    %27 = vector.broadcast %cst_12 : f32 to vector<8x512xf32>
    %28 = arith.maximumf %26, %27 : vector<8x512xf32>
    %29 = arith.truncf %28 : vector<8x512xf32> to vector<8x512xbf16>
    %cst_13 = arith.constant dense<0.000000e+00> : vector<8x128xf32>
    %30 = tpu.matmul %29, %22, %cst_13 {dimension_numbers = #tpu.dot_dimension_numbers<[1], [1], [0], [0], [0, 0, 1, 0], [], []>} : vector<8x512xbf16>, vector<128x512xbf16>, vector<8x128xf32> -> vector<8x128xf32>
    %31 = vector.broadcast %20 : vector<1x128xf32> to vector<8x128xf32>
    %32 = arith.addf %30, %31 : vector<8x128xf32>
    %c0_14 = arith.constant 0 : index
    %c0_15 = arith.constant 0 : index
    %33 = vector.load %arg3[%c0_14, %c0_15] : memref<8x128xf32, #tpu.memory_space<vmem>>, vector<8x128xf32>
    tpu.vector_store %arg3[%c0_14, %c0_15], %32 {strides = array<i32>} : memref<8x128xf32, #tpu.memory_space<vmem>>, vector<8x128xf32>,
    return
  }
}

</mosaic_0001>

<llo_original>
// kernel: tpu_custom_call.1
$region0: #{tpu_custom_call.1}
  #allocation0 [shape = 'u32[]', space=smem, size = 0x4, offset = 0x4, fixed_abs, tag = 'smem constant byte address 0x4 - core index']
  #allocation1 [shape = 'u32[144,128]{1,0:T(1,128)}', space=vmem, size = 0x12000, scoped, tag = 'internal scratch']
  %s0 = inlined_call_operand.hbm [shape: f32[8,512], index: 0, kind: input, shape index: {}]
  %s1 = inlined_call_operand.hbm [shape: f32[40,512], index: 1, kind: input, shape index: {}]
  %s2 = inlined_call_operand.hbm [shape: bf16[160,512], index: 2, kind: input, shape index: {}]
  %s3 = inlined_call_operand.hbm [shape: f32[8,128], index: 3, kind: output, shape index: {}]
  %s4 = sld [smem:[#allocation0]]
  $region34: #{tpu_custom_call.1} parent=0
    _
  %s6 = ssub.s32 1, %s4
  %s7 = scalar_select 0, %s6, %s4
  $region1: #{tpu_custom_call.1} parent=0
    #allocation2 [shape = 'u8[16384]{0}', space=vmem, size = 0x4000, scoped, tag = 'input window, operand 0, single buffered']
    #allocation3 [shape = 's32[1]{0}', space=sflag, size = 0x4, scoped, tag = 'scoped memory for tpu_custom_call.1']
    #allocation4 [shape = 's32[1]{0}', space=sflag, size = 0x4, scoped, tag = 'scoped memory for tpu_custom_call.1']
    #allocation5 [shape = 'u8[81920]{0}', space=vmem, size = 0x14000, scoped, tag = 'input window, operand 1, single buffered']
    #allocation6 [shape = 's32[1]{0}', space=sflag, size = 0x4, scoped, tag = 'scoped memory for tpu_custom_call.1']
    #allocation7 [shape = 'u8[163840]{0}', space=vmem, size = 0x28000, scoped, tag = 'input window, operand 2, single buffered']
    #allocation8 [shape = 'u8[4096]{0}', space=vmem, size = 0x1000, scoped, tag = 'output window, operand 0, single buffered']
    %8 = vsyncpa [#allocation3], 0
    %9 = vsyncpa [#allocation6], 0
    %10 = vsyncpa [#allocation4], 0
    // Predicated region
    $region2: #{tpu_custom_call.1} parent=1 // pred_check
      _
    $region3: #{tpu_custom_call.1} parent=1 // pred_check_branch
      %12 = sbr.rel (0) target = $region5
    $region4: #{tpu_custom_call.1} parent=1 // pred_region
      %s14 = ssub.s32 512, 512
      %15 = vsyncadd [#allocation3], %s14
      %s17 = sshll.u32 [#allocation2], 4
      %s18 = int_to_ptr.vmem [resolvable:$true] %s17
      %20 = dma.hbm_to_vmem [thread:$0]  %s0, 512, %s18, [#allocation3]
    $region5: #{tpu_custom_call.1} parent=1 // pred_fallthru
      _
    // Predicated region
    $region6: #{tpu_custom_call.1} parent=1 // pred_check
      _
    $region7: #{tpu_custom_call.1} parent=1 // pred_check_branch
      %22 = sbr.rel (0) target = $region9
    $region8: #{tpu_custom_call.1} parent=1 // pred_region
      %s24 = ssub.s32 2560, 2560
      %25 = vsyncadd [#allocation6], %s24
      %s26 = sshll.u32 [#allocation5], 4
      %s27 = int_to_ptr.vmem [resolvable:$true] %s26
      %32 = dma.hbm_to_vmem [thread:$0]  %s1, 2560, %s27, [#allocation6], 512, 512, 32
    $region9: #{tpu_custom_call.1} parent=1 // pred_fallthru
      _
    // Predicated region
    $region10: #{tpu_custom_call.1} parent=1 // pred_check
      _
    $region11: #{tpu_custom_call.1} parent=1 // pred_check_branch
      %34 = sbr.rel (0) target = $region13
    $region12: #{tpu_custom_call.1} parent=1 // pred_region
      %s36 = ssub.s32 5120, 5120
      %37 = vsyncadd [#allocation6], %s36
      %s38 = sshll.u32 [#allocation7], 4
      %s39 = int_to_ptr.vmem [resolvable:$true] %s38
      %44 = dma.hbm_to_vmem [thread:$0]  %s2, 5120, %s39, [#allocation6], 256, 256, 16
    $region13: #{tpu_custom_call.1} parent=1 // pred_fallthru
      _
    // Predicated region
    $region14: #{tpu_custom_call.1} parent=1 // pred_check
      _
    $region15: #{tpu_custom_call.1} parent=1 // pred_check_branch
      %46 = sbr.rel (0) target = $region17
    $region16: #{tpu_custom_call.1} parent=1 // pred_region
      %47 = dma.done [#allocation3], 512
    $region17: #{tpu_custom_call.1} parent=1 // pred_fallthru
      _
    // Predicated region
    $region18: #{tpu_custom_call.1} parent=1 // pred_check
      _
    $region19: #{tpu_custom_call.1} parent=1 // pred_check_branch
      %49 = sbr.rel (0) target = $region21
    $region20: #{tpu_custom_call.1} parent=1 // pred_region
      %50 = dma.done [#allocation6], 2560
    $region21: #{tpu_custom_call.1} parent=1 // pred_fallthru
      _
    // Predicated region
    $region22: #{tpu_custom_call.1} parent=1 // pred_check
      _
    $region23: #{tpu_custom_call.1} parent=1 // pred_check_branch
      %52 = sbr.rel (0) target = $region25
    $region24: #{tpu_custom_call.1} parent=1 // pred_region
      %53 = dma.done [#allocation6], 5120
    $region25: #{tpu_custom_call.1} parent=1 // pred_fallthru
      _
    %v55 = vld [vmem:[#allocation5] sm:$0xff]
    %v56 = vld [vmem:[#allocation5 + $0x20] sm:$0xff]
    %v57 = vld [vmem:[#allocation5 + $0x40] sm:$0xff]
    %v58 = vld [vmem:[#allocation5 + $0x60] sm:$0xff]
    %v59 = vld [vmem:[#allocation5 + $0x80] sm:$0xff]
    %v60 = vld [vmem:[#allocation5 + $0x88] sm:$0xff]
    %v61 = vld [vmem:[#allocation5 + $0x90] sm:$0xff]
    %v62 = vld [vmem:[#allocation5 + $0x98] sm:$0xff]
    %v63 = vld [vmem:[#allocation2] sm:$0xff]
    %v64 = vld [vmem:[#allocation2 + $0x8] sm:$0xff]
    %v65 = vld [vmem:[#allocation2 + $0x10] sm:$0xff]
    %v66 = vld [vmem:[#allocation2 + $0x18] sm:$0xff]
    %vm67 = vcmask 64512
    %v69 = vsel %vm67, %v55, 0
    %v72 = vsel %vm67, %v56, 0
    %v75 = vsel %vm67, %v57, 0
    %v78 = vsel %vm67, %v58, 0
    %80 = vmatprep.subr.mxu0 0.0
    %81 = vmatpush1.msra.mxu0 0.0
    %82 = vmatprep.subr.mxu0 0.0
    %83 = vmatpush1.msra.mxu0 0.0
    %84 = vmatprep.subr.mxu0 0.0
    %85 = vmatpush1.msra.mxu0 0.0
    %86 = vmatprep.subr.mxu0 0.0
    %87 = vmatpush1.msra.mxu0 0.0
    %88 = vmatprep.subr.mxu0 0.0
    %89 = vmatpush1.msra.mxu0 0.0
    %90 = vmatprep.subr.mxu0 0.0
    %91 = vmatpush1.msra.mxu0 0.0
    %92 = vmatprep.subr.mxu0 0.0
    %93 = vmatpush1.msra.mxu0 0.0
    %94 = vmatprep.subr.mxu0 0.0
    %95 = vmatpush1.msra.mxu0 0.0
    %96 = vmatprep.subr.mxu0 0.0
    %97 = vmatpush1.msra.mxu0 0.0
    %98 = vmatprep.subr.mxu0 0.0
    %99 = vmatpush1.msra.mxu0 0.0
    %100 = vmatprep.subr.mxu0 0.0
    %101 = vmatpush1.msra.mxu0 0.0
    %102 = vmatprep.subr.mxu0 0.0
    %103 = vmatpush1.msra.mxu0 0.0
    %104 = vmatprep.subr.mxu0 0.0
    %105 = vmatpush1.msra.mxu0 0.0
    %106 = vmatprep.subr.mxu0 0.0
    %107 = vmatpush1.msra.mxu0 0.0
    %108 = vmatprep.subr.mxu0 0.0
    %109 = vmatpush1.msra.mxu0 0.0
    %110 = vmatprep.subr.mxu0 %v64
    %111 = vmatpush1.msra.mxu0 %v63
    %112 = vmatprep.subr.mxu0 0.0
    %113 = vmatpush2.msra.mxu0 0.0
    %114 = vmatprep.subr.mxu0 0.0
    %115 = vmatpush2.msra.mxu0 0.0
    %116 = vmatprep.subr.mxu0 0.0
    %117 = vmatpush2.msra.mxu0 0.0
    %118 = vmatprep.subr.mxu0 0.0
    %119 = vmatpush2.msra.mxu0 0.0
    %120 = vmatprep.subr.mxu0 0.0
    %121 = vmatpush2.msra.mxu0 0.0
    %122 = vmatprep.subr.mxu0 0.0
    %123 = vmatpush2.msra.mxu0 0.0
    %124 = vmatprep.subr.mxu0 0.0
    %125 = vmatpush2.msra.mxu0 0.0
    %126 = vmatprep.subr.mxu0 0.0
    %127 = vmatpush2.msra.mxu0 0.0
    %128 = vmatprep.subr.mxu0 0.0
    %129 = vmatpush2.msra.mxu0 0.0
    %130 = vmatprep.subr.mxu0 0.0
    %131 = vmatpush2.msra.mxu0 0.0
    %132 = vmatprep.subr.mxu0 0.0
    %133 = vmatpush2.msra.mxu0 0.0
    %134 = vmatprep.subr.mxu0 0.0
    %135 = vmatpush2.msra.mxu0 0.0
    %136 = vmatprep.subr.mxu0 0.0
    %137 = vmatpush2.msra.mxu0 0.0
    %138 = vmatprep.subr.mxu0 0.0
    %139 = vmatpush2.msra.mxu0 0.0
    %140 = vmatprep.subr.mxu0 0.0
    %141 = vmatpush2.msra.mxu0 0.0
    %142 = vmatprep.subr.mxu0 0.0
    %143 = vmatpush2.msra.mxu0 0.0
    %144 = vmatprep.mubr.f32.mxu0 0.0
    %145 = vmatmul.mubr.f32.gmra.mxu0 %v69
    %v146 = vpop.f32.mrf.mxu0
    %v147 = vadd.f32 0.0, %v146
    %v148 = vpop.f32.mrf.mxu0
    %v149 = vadd.f32 0.0, %v148
    %150 = vmatprep.mubr.f32.mxu0 0.0
    %151 = vmatmul.mubr.f32.gmra.mxu0 %v72
    %v152 = vpop.f32.mrf.mxu0
    %v153 = vadd.f32 0.0, %v152
    %v154 = vpop.f32.mrf.mxu0
    %v155 = vadd.f32 0.0, %v154
    %156 = vmatprep.mubr.f32.mxu0 0.0
    %157 = vmatmul.mubr.f32.gmra.mxu0 %v75
    %v158 = vpop.f32.mrf.mxu0
    %v159 = vadd.f32 0.0, %v158
    %v160 = vpop.f32.mrf.mxu0
    %v161 = vadd.f32 0.0, %v160
    %162 = vmatprep.mubr.f32.mxu0 0.0
    %163 = vmatmul.mubr.f32.gmra.mxu0 %v78
    %v164 = vpop.f32.mrf.mxu0
    %v165 = vadd.f32 0.0, %v164
    %v166 = vpop.f32.mrf.mxu0
    %v167 = vadd.f32 0.0, %v166
    %168 = vdwg.mxu0
    %169 = vmatprep.subr.mxu0 0.0
    %170 = vmatpush1.msra.mxu0 0.0
    %171 = vmatprep.subr.mxu0 0.0
    %172 = vmatpush1.msra.mxu0 0.0
    %173 = vmatprep.subr.mxu0 0.0
    %174 = vmatpush1.msra.mxu0 0.0
    %175 = vmatprep.subr.mxu0 0.0
    %176 = vmatpush1.msra.mxu0 0.0
    %177 = vmatprep.subr.mxu0 0.0
    %178 = vmatpush1.msra.mxu0 0.0
    %179 = vmatprep.subr.mxu0 0.0
    %180 = vmatpush1.msra.mxu0 0.0
    %181 = vmatprep.subr.mxu0 0.0
    %182 = vmatpush1.msra.mxu0 0.0
    %183 = vmatprep.subr.mxu0 0.0
    %184 = vmatpush1.msra.mxu0 0.0
    %185 = vmatprep.subr.mxu0 0.0
    %186 = vmatpush1.msra.mxu0 0.0
    %187 = vmatprep.subr.mxu0 0.0
    %188 = vmatpush1.msra.mxu0 0.0
    %189 = vmatprep.subr.mxu0 0.0
    %190 = vmatpush1.msra.mxu0 0.0
    %191 = vmatprep.subr.mxu0 0.0
    %192 = vmatpush1.msra.mxu0 0.0
    %193 = vmatprep.subr.mxu0 0.0
    %194 = vmatpush1.msra.mxu0 0.0
    %195 = vmatprep.subr.mxu0 0.0
    %196 = vmatpush1.msra.mxu0 0.0
    %197 = vmatprep.subr.mxu0 0.0
    %198 = vmatpush1.msra.mxu0 0.0
    %199 = vmatprep.subr.mxu0 %v66
    %200 = vmatpush1.msra.mxu0 %v65
    %201 = vmatprep.subr.mxu0 0.0
    %202 = vmatpush2.msra.mxu0 0.0
    %203 = vmatprep.subr.mxu0 0.0
    %204 = vmatpush2.msra.mxu0 0.0
    %205 = vmatprep.subr.mxu0 0.0
    %206 = vmatpush2.msra.mxu0 0.0
    %207 = vmatprep.subr.mxu0 0.0
    %208 = vmatpush2.msra.mxu0 0.0
    %209 = vmatprep.subr.mxu0 0.0
    %210 = vmatpush2.msra.mxu0 0.0
    %211 = vmatprep.subr.mxu0 0.0
    %212 = vmatpush2.msra.mxu0 0.0
    %213 = vmatprep.subr.mxu0 0.0
    %214 = vmatpush2.msra.mxu0 0.0
    %215 = vmatprep.subr.mxu0 0.0
    %216 = vmatpush2.msra.mxu0 0.0
    %217 = vmatprep.subr.mxu0 0.0
    %218 = vmatpush2.msra.mxu0 0.0
    %219 = vmatprep.subr.mxu0 0.0
    %220 = vmatpush2.msra.mxu0 0.0
    %221 = vmatprep.subr.mxu0 0.0
    %222 = vmatpush2.msra.mxu0 0.0
    %223 = vmatprep.subr.mxu0 0.0
    %224 = vmatpush2.msra.mxu0 0.0
    %225 = vmatprep.subr.mxu0 0.0
    %226 = vmatpush2.msra.mxu0 0.0
    %227 = vmatprep.subr.mxu0 0.0
    %228 = vmatpush2.msra.mxu0 0.0
    %229 = vmatprep.subr.mxu0 0.0
    %230 = vmatpush2.msra.mxu0 0.0
    %231 = vmatprep.subr.mxu0 0.0
    %232 = vmatpush2.msra.mxu0 0.0
    %233 = vmatprep.mubr.f32.mxu0 0.0
    %234 = vmatmul.mubr.f32.gmra.mxu0 %v69
    %v235 = vpop.f32.mrf.mxu0
    %v236 = vadd.f32 0.0, %v235
    %v237 = vpop.f32.mrf.mxu0
    %v238 = vadd.f32 0.0, %v237
    %239 = vmatprep.mubr.f32.mxu0 0.0
    %240 = vmatmul.mubr.f32.gmra.mxu0 %v72
    %v241 = vpop.f32.mrf.mxu0
    %v242 = vadd.f32 0.0, %v241
    %v243 = vpop.f32.mrf.mxu0
    %v244 = vadd.f32 0.0, %v243
    %245 = vmatprep.mubr.f32.mxu0 0.0
    %246 = vmatmul.mubr.f32.gmra.mxu0 %v75
    %v247 = vpop.f32.mrf.mxu0
    %v248 = vadd.f32 0.0, %v247
    %v249 = vpop.f32.mrf.mxu0
    %v250 = vadd.f32 0.0, %v249
    %251 = vmatprep.mubr.f32.mxu0 0.0
    %252 = vmatmul.mubr.f32.gmra.mxu0 %v78
    %v253 = vpop.f32.mrf.mxu0
    %v254 = vadd.f32 0.0, %v253
    %v255 = vpop.f32.mrf.mxu0
    %v256 = vadd.f32 0.0, %v255
    %257 = vdwg.mxu0
    %v258 = vmax.f32 %v147, 0.0
    %v259 = vmax.f32 %v149, 0.0
    %v260 = vmax.f32 %v236, 0.0
    %v261 = vmax.f32 %v238, 0.0
    %v262 = vmax.f32 %v153, 0.0
    %v263 = vmax.f32 %v155, 0.0
    %v264 = vmax.f32 %v242, 0.0
    %v265 = vmax.f32 %v244, 0.0
    %v266 = vmax.f32 %v159, 0.0
    %v267 = vmax.f32 %v161, 0.0
    %v268 = vmax.f32 %v248, 0.0
    %v269 = vmax.f32 %v250, 0.0
    %v270 = vmax.f32 %v165, 0.0
    %v271 = vmax.f32 %v167, 0.0
    %v272 = vmax.f32 %v254, 0.0
    %v273 = vmax.f32 %v256, 0.0
    %v274 = vlaneseq
    %v275 = vshrl.u32 %v274, 7
    %v276 = vlaneseq
    %v277 = vand.u32 %v276, 127
    %v278 = vadd.s32 %v277, 128
    %v279 = vadd.s32 %v277, 256
    %v280 = vadd.s32 %v277, 384
    %v281 = vmul.u32 %v275, 256
    %vm282 = vcmp.ge.s32.totalorder %v277, %v281
    %vm283 = vcmp.ge.s32.totalorder %v278, %v281
    %vm284 = vcmp.ge.s32.totalorder %v279, %v281
    %vm285 = vcmp.ge.s32.totalorder %v280, %v281
    %v286 = vadd.s32 %v281, 256
    %vm287 = vcmp.lt.s32.totalorder %v277, %v286
    %vm288 = vcmp.lt.s32.totalorder %v278, %v286
    %vm289 = vcmp.lt.s32.totalorder %v279, %v286
    %vm290 = vcmp.lt.s32.totalorder %v280, %v286
    %vm291 = vmand %vm282, %vm287
    %vm292 = vmand %vm283, %vm288
    %vm293 = vmand %vm284, %vm289
    %vm294 = vmand %vm285, %vm290
    %v295 = vsel %vm291, 1.0, 0.0
    %v296 = vsel %vm292, 1.0, 0.0
    %v297 = vsel %vm293, 1.0, 0.0
    %v298 = vsel %vm294, 1.0, 0.0
    %299 = vmatprep.subr.mxu0 0.0
    %300 = vmatpush1.xpose.msra.mxu0 0.0
    %301 = vmatprep.subr.mxu0 0.0
    %302 = vmatpush1.xpose.msra.mxu0 0.0
    %303 = vmatprep.subr.mxu0 0.0
    %304 = vmatpush1.xpose.msra.mxu0 0.0
    %305 = vmatprep.subr.mxu0 0.0
    %306 = vmatpush1.xpose.msra.mxu0 0.0
    %307 = vmatprep.subr.mxu0 0.0
    %308 = vmatpush1.xpose.msra.mxu0 0.0
    %309 = vmatprep.subr.mxu0 0.0
    %310 = vmatpush1.xpose.msra.mxu0 0.0
    %311 = vmatprep.subr.mxu0 0.0
    %312 = vmatpush1.xpose.msra.mxu0 0.0
    %313 = vmatprep.subr.mxu0 0.0
    %314 = vmatpush1.xpose.msra.mxu0 0.0
    %315 = vmatprep.subr.mxu0 0.0
    %316 = vmatpush1.xpose.msra.mxu0 0.0
    %317 = vmatprep.subr.mxu0 0.0
    %318 = vmatpush1.xpose.msra.mxu0 0.0
    %319 = vmatprep.subr.mxu0 0.0
    %320 = vmatpush1.xpose.msra.mxu0 0.0
    %321 = vmatprep.subr.mxu0 0.0
    %322 = vmatpush1.xpose.msra.mxu0 0.0
    %323 = vmatprep.subr.mxu0 %v271
    %324 = vmatpush1.xpose.msra.mxu0 %v270
    %325 = vmatprep.subr.mxu0 %v267
    %326 = vmatpush1.xpose.msra.mxu0 %v266
    %327 = vmatprep.subr.mxu0 %v263
    %328 = vmatpush1.xpose.msra.mxu0 %v262
    %329 = vmatprep.subr.mxu0 %v259
    %330 = vmatpush1.xpose.msra.mxu0 %v258
    %331 = vmatprep.subr.mxu0 0.0
    %332 = vmatpush2.xpose.msra.mxu0 0.0
    %333 = vmatprep.subr.mxu0 0.0
    %334 = vmatpush2.xpose.msra.mxu0 0.0
    %335 = vmatprep.subr.mxu0 0.0
    %336 = vmatpush2.xpose.msra.mxu0 0.0
    %337 = vmatprep.subr.mxu0 0.0
    %338 = vmatpush2.xpose.msra.mxu0 0.0
    %339 = vmatprep.subr.mxu0 0.0
    %340 = vmatpush2.xpose.msra.mxu0 0.0
    %341 = vmatprep.subr.mxu0 0.0
    %342 = vmatpush2.xpose.msra.mxu0 0.0
    %343 = vmatprep.subr.mxu0 0.0
    %344 = vmatpush2.xpose.msra.mxu0 0.0
    %345 = vmatprep.subr.mxu0 0.0
    %346 = vmatpush2.xpose.msra.mxu0 0.0
    %347 = vmatprep.subr.mxu0 0.0
    %348 = vmatpush2.xpose.msra.mxu0 0.0
    %349 = vmatprep.subr.mxu0 0.0
    %350 = vmatpush2.xpose.msra.mxu0 0.0
    %351 = vmatprep.subr.mxu0 0.0
    %352 = vmatpush2.xpose.msra.mxu0 0.0
    %353 = vmatprep.subr.mxu0 0.0
    %354 = vmatpush2.xpose.msra.mxu0 0.0
    %355 = vmatprep.subr.mxu0 0.0
    %356 = vmatpush2.xpose.msra.mxu0 0.0
    %357 = vmatprep.subr.mxu0 0.0
    %358 = vmatpush2.xpose.msra.mxu0 0.0
    %359 = vmatprep.subr.mxu0 0.0
    %360 = vmatpush2.xpose.msra.mxu0 0.0
    %361 = vmatprep.subr.mxu0 0.0
    %362 = vmatpush2.xpose.msra.mxu0 0.0
    %363 = vmatprep.mubr.f32.mxu0 %v296
    %364 = vmatmul.mubr.f32.gmra.mxu0 %v295
    %v365 = vpop.f32.mrf.mxu0
    %v366 = vadd.f32 0.0, %v365
    %v367 = vpop.f32.mrf.mxu0
    %368 = vdwg.mxu0
    %369 = vmatprep.subr.mxu0 0.0
    %370 = vmatpush1.xpose.msra.mxu0 0.0
    %371 = vmatprep.subr.mxu0 0.0
    %372 = vmatpush1.xpose.msra.mxu0 0.0
    %373 = vmatprep.subr.mxu0 0.0
    %374 = vmatpush1.xpose.msra.mxu0 0.0
    %375 = vmatprep.subr.mxu0 0.0
    %376 = vmatpush1.xpose.msra.mxu0 0.0
    %377 = vmatprep.subr.mxu0 0.0
    %378 = vmatpush1.xpose.msra.mxu0 0.0
    %379 = vmatprep.subr.mxu0 0.0
    %380 = vmatpush1.xpose.msra.mxu0 0.0
    %381 = vmatprep.subr.mxu0 0.0
    %382 = vmatpush1.xpose.msra.mxu0 0.0
    %383 = vmatprep.subr.mxu0 0.0
    %384 = vmatpush1.xpose.msra.mxu0 0.0
    %385 = vmatprep.subr.mxu0 0.0
    %386 = vmatpush1.xpose.msra.mxu0 0.0
    %387 = vmatprep.subr.mxu0 0.0
    %388 = vmatpush1.xpose.msra.mxu0 0.0
    %389 = vmatprep.subr.mxu0 0.0
    %390 = vmatpush1.xpose.msra.mxu0 0.0
    %391 = vmatprep.subr.mxu0 0.0
    %392 = vmatpush1.xpose.msra.mxu0 0.0
    %393 = vmatprep.subr.mxu0 %v273
    %394 = vmatpush1.xpose.msra.mxu0 %v272
    %395 = vmatprep.subr.mxu0 %v269
    %396 = vmatpush1.xpose.msra.mxu0 %v268
    %397 = vmatprep.subr.mxu0 %v265
    %398 = vmatpush1.xpose.msra.mxu0 %v264
    %399 = vmatprep.subr.mxu0 %v261
    %400 = vmatpush1.xpose.msra.mxu0 %v260
    %401 = vmatprep.subr.mxu0 0.0
    %402 = vmatpush2.xpose.msra.mxu0 0.0
    %403 = vmatprep.subr.mxu0 0.0
    %404 = vmatpush2.xpose.msra.mxu0 0.0
    %405 = vmatprep.subr.mxu0 0.0
    %406 = vmatpush2.xpose.msra.mxu0 0.0
    %407 = vmatprep.subr.mxu0 0.0
    %408 = vmatpush2.xpose.msra.mxu0 0.0
    %409 = vmatprep.subr.mxu0 0.0
    %410 = vmatpush2.xpose.msra.mxu0 0.0
    %411 = vmatprep.subr.mxu0 0.0
    %412 = vmatpush2.xpose.msra.mxu0 0.0
    %413 = vmatprep.subr.mxu0 0.0
    %414 = vmatpush2.xpose.msra.mxu0 0.0
    %415 = vmatprep.subr.mxu0 0.0
    %416 = vmatpush2.xpose.msra.mxu0 0.0
    %417 = vmatprep.subr.mxu0 0.0
    %418 = vmatpush2.xpose.msra.mxu0 0.0
    %419 = vmatprep.subr.mxu0 0.0
    %420 = vmatpush2.xpose.msra.mxu0 0.0
    %421 = vmatprep.subr.mxu0 0.0
    %422 = vmatpush2.xpose.msra.mxu0 0.0
    %423 = vmatprep.subr.mxu0 0.0
    %424 = vmatpush2.xpose.msra.mxu0 0.0
    %425 = vmatprep.subr.mxu0 0.0
    %426 = vmatpush2.xpose.msra.mxu0 0.0
    %427 = vmatprep.subr.mxu0 0.0
    %428 = vmatpush2.xpose.msra.mxu0 0.0
    %429 = vmatprep.subr.mxu0 0.0
    %430 = vmatpush2.xpose.msra.mxu0 0.0
    %431 = vmatprep.subr.mxu0 0.0
    %432 = vmatpush2.xpose.msra.mxu0 0.0
    %433 = vmatprep.mubr.f32.mxu0 %v298
    %434 = vmatmul.mubr.f32.gmra.mxu0 %v297
    %v435 = vpop.f32.mrf.mxu0
    %v436 = vadd.f32 %v366, %v435
    %v437 = vpop.f32.mrf.mxu0
    %438 = vdwg.mxu0
    %v439 = vld [vmem:[#allocation7] sm:$0xff]
    %v440 = vld [vmem:[#allocation7 + $0x8] sm:$0xff]
    %v441 = vld [vmem:[#allocation7 + $0x10] sm:$0xff]
    %v442 = vld [vmem:[#allocation7 + $0x18] sm:$0xff]
    %v443 = vld [vmem:[#allocation7 + $0x20] sm:$0xff]
    %v444 = vld [vmem:[#allocation7 + $0x28] sm:$0xff]
    %v445 = vld [vmem:[#allocation7 + $0x30] sm:$0xff]
    %v446 = vld [vmem:[#allocation7 + $0x38] sm:$0xff]
    %v447 = vld [vmem:[#allocation7 + $0x40] sm:$0xff]
    %v448 = vld [vmem:[#allocation7 + $0x48] sm:$0xff]
    %v449 = vld [vmem:[#allocation7 + $0x50] sm:$0xff]
    %v450 = vld [vmem:[#allocation7 + $0x58] sm:$0xff]
    %v451 = vld [vmem:[#allocation7 + $0x60] sm:$0xff]
    %v452 = vld [vmem:[#allocation7 + $0x68] sm:$0xff]
    %v453 = vld [vmem:[#allocation7 + $0x70] sm:$0xff]
    %v454 = vld [vmem:[#allocation7 + $0x78] sm:$0xff]
    %v455 = vld [vmem:[#allocation7 + $0x80] sm:$0xff]
    %v456 = vld [vmem:[#allocation7 + $0x88] sm:$0xff]
    %v457 = vld [vmem:[#allocation7 + $0x90] sm:$0xff]
    %v458 = vld [vmem:[#allocation7 + $0x98] sm:$0xff]
    %v459 = vld [vmem:[#allocation7 + $0xa0] sm:$0xff]
    %v460 = vld [vmem:[#allocation7 + $0xa8] sm:$0xff]
    %v461 = vld [vmem:[#allocation7 + $0xb0] sm:$0xff]
    %v462 = vld [vmem:[#allocation7 + $0xb8] sm:$0xff]
    %v463 = vld [vmem:[#allocation7 + $0xc0] sm:$0xff]
    %v464 = vld [vmem:[#allocation7 + $0xc8] sm:$0xff]
    %v465 = vld [vmem:[#allocation7 + $0xd0] sm:$0xff]
    %v466 = vld [vmem:[#allocation7 + $0xd8] sm:$0xff]
    %v467 = vld [vmem:[#allocation7 + $0xe0] sm:$0xff]
    %v468 = vld [vmem:[#allocation7 + $0xe8] sm:$0xff]
    %v469 = vld [vmem:[#allocation7 + $0xf0] sm:$0xff]
    %v470 = vld [vmem:[#allocation7 + $0xf8] sm:$0xff]
    %v471 = vld [vmem:[#allocation7 + $0x100] sm:$0xff]
    %v472 = vld [vmem:[#allocation7 + $0x108] sm:$0xff]
    %v473 = vld [vmem:[#allocation7 + $0x110] sm:$0xff]
    %v474 = vld [vmem:[#allocation7 + $0x118] sm:$0xff]
    %v475 = vld [vmem:[#allocation7 + $0x120] sm:$0xff]
    %v476 = vld [vmem:[#allocation7 + $0x128] sm:$0xff]
    %v477 = vld [vmem:[#allocation7 + $0x130] sm:$0xff]
    %v478 = vld [vmem:[#allocation7 + $0x138] sm:$0xff]
    %v479 = vpack.c.bf16 %v436, %v436
    %v480 = vlaneseq
    %v481 = vshrl.u32 %v480, 7
    %v482 = vsub.s32 0, %v481
    %v483 = vrot.slane %v59, %v482
    %v484 = vlaneseq
    %v485 = vshrl.u32 %v484, 7
    %v486 = vsub.s32 0, %v485
    %v487 = vrot.slane %v60, %v486
    %v488 = vlaneseq
    %v489 = vshrl.u32 %v488, 7
    %v490 = vsub.s32 0, %v489
    %v491 = vrot.slane %v61, %v490
    %v492 = vlaneseq
    %v493 = vshrl.u32 %v492, 7
    %v494 = vsub.s32 0, %v493
    %v495 = vrot.slane %v62, %v494
    %v504 = vunpack.c.l.b16 %v439
    %v505 = vunpack.c.h.b16 %v439
    %v506 = vunpack.c.l.b16 %v440
    %v507 = vunpack.c.h.b16 %v440
    %v508 = vunpack.c.l.b16 %v441
    %v509 = vunpack.c.h.b16 %v441
    %v510 = vunpack.c.l.b16 %v442
    %v511 = vunpack.c.h.b16 %v442
    %v512 = vunpack.c.l.b16 %v443
    %v513 = vunpack.c.h.b16 %v443
    %v514 = vunpack.c.l.b16 %v444
    %v515 = vunpack.c.h.b16 %v444
    %v516 = vunpack.c.l.b16 %v445
    %v517 = vunpack.c.h.b16 %v445
    %v518 = vunpack.c.l.b16 %v446
    %v519 = vunpack.c.h.b16 %v446
    %v520 = vpack.c.b16 %v508, %v504
    %v521 = vpack.c.b16 %v509, %v505
    %v522 = vpack.c.b16 %v510, %v506
    %v523 = vpack.c.b16 %v511, %v507
    %v524 = vpack.c.b16 %v516, %v512
    %v525 = vpack.c.b16 %v517, %v513
    %v526 = vpack.c.b16 %v518, %v514
    %v527 = vpack.c.b16 %v519, %v515
    %vm536 = vcmask 261120
    %v538 = vsel %vm536, %v479, 0
    %540 = vmatprep.subr.bf16.mxu0 0
    %541 = vmatpush1.bf16.msra.mxu0 0
    %542 = vmatprep.subr.bf16.mxu0 0
    %543 = vmatpush1.bf16.msra.mxu0 0
    %544 = vmatprep.subr.bf16.mxu0 0
    %545 = vmatpush1.bf16.msra.mxu0 0
    %546 = vmatprep.subr.bf16.mxu0 0
    %547 = vmatpush1.bf16.msra.mxu0 0
    %548 = vmatprep.subr.bf16.mxu0 0
    %549 = vmatpush1.bf16.msra.mxu0 0
    %550 = vmatprep.subr.bf16.mxu0 0
    %551 = vmatpush1.bf16.msra.mxu0 0
    %552 = vmatprep.subr.bf16.mxu0 %v525
    %553 = vmatpush1.bf16.msra.mxu0 %v524
    %554 = vmatprep.subr.bf16.mxu0 %v521
    %555 = vmatpush1.bf16.msra.mxu0 %v520
    %556 = vmatprep.subr.bf16.mxu0 0
    %557 = vmatpush2.bf16.msra.mxu0 0
    %558 = vmatprep.subr.bf16.mxu0 0
    %559 = vmatpush2.bf16.msra.mxu0 0
    %560 = vmatprep.subr.bf16.mxu0 0
    %561 = vmatpush2.bf16.msra.mxu0 0
    %562 = vmatprep.subr.bf16.mxu0 0
    %563 = vmatpush2.bf16.msra.mxu0 0
    %564 = vmatprep.subr.bf16.mxu0 0
    %565 = vmatpush2.bf16.msra.mxu0 0
    %566 = vmatprep.subr.bf16.mxu0 0
    %567 = vmatpush2.bf16.msra.mxu0 0
    %568 = vmatprep.subr.bf16.mxu0 0
    %569 = vmatpush2.bf16.msra.mxu0 0
    %570 = vmatprep.subr.bf16.mxu0 0
    %571 = vmatpush2.bf16.msra.mxu0 0
    %572 = vmatprep.mubr.bf16.mxu0 0
    %573 = vmatmul.mubr.bf16.gmra.mxu0 %v538
    %v574 = vpop.f32.mrf.mxu0
    %v575 = vadd.f32 %v483, %v574
    %v576 = vpop.f32.mrf.mxu0
    %v577 = vadd.f32 %v487, %v576
    %v578 = vpop.f32.mrf.mxu0
    %v579 = vpop.f32.mrf.mxu0
    %580 = vdwg.mxu0
    %581 = vmatprep.subr.bf16.mxu0 0
    %582 = vmatpush1.bf16.msra.mxu0 0
    %583 = vmatprep.subr.bf16.mxu0 0
    %584 = vmatpush1.bf16.msra.mxu0 0
    %585 = vmatprep.subr.bf16.mxu0 0
    %586 = vmatpush1.bf16.msra.mxu0 0
    %587 = vmatprep.subr.bf16.mxu0 0
    %588 = vmatpush1.bf16.msra.mxu0 0
    %589 = vmatprep.subr.bf16.mxu0 0
    %590 = vmatpush1.bf16.msra.mxu0 0
    %591 = vmatprep.subr.bf16.mxu0 0
    %592 = vmatpush1.bf16.msra.mxu0 0
    %593 = vmatprep.subr.bf16.mxu0 %v527
    %594 = vmatpush1.bf16.msra.mxu0 %v526
    %595 = vmatprep.subr.bf16.mxu0 %v523
    %596 = vmatpush1.bf16.msra.mxu0 %v522
    %597 = vmatprep.subr.bf16.mxu0 0
    %598 = vmatpush2.bf16.msra.mxu0 0
    %599 = vmatprep.subr.bf16.mxu0 0
    %600 = vmatpush2.bf16.msra.mxu0 0
    %601 = vmatprep.subr.bf16.mxu0 0
    %602 = vmatpush2.bf16.msra.mxu0 0
    %603 = vmatprep.subr.bf16.mxu0 0
    %604 = vmatpush2.bf16.msra.mxu0 0
    %605 = vmatprep.subr.bf16.mxu0 0
    %606 = vmatpush2.bf16.msra.mxu0 0
    %607 = vmatprep.subr.bf16.mxu0 0
    %608 = vmatpush2.bf16.msra.mxu0 0
    %609 = vmatprep.subr.bf16.mxu0 0
    %610 = vmatpush2.bf16.msra.mxu0 0
    %611 = vmatprep.subr.bf16.mxu0 0
    %612 = vmatpush2.bf16.msra.mxu0 0
    %613 = vmatprep.mubr.bf16.mxu0 0
    %614 = vmatmul.mubr.bf16.gmra.mxu0 %v538
    %v615 = vpop.f32.mrf.mxu0
    %v616 = vadd.f32 %v491, %v615
    %v617 = vpop.f32.mrf.mxu0
    %v618 = vadd.f32 %v495, %v617
    %v619 = vpop.f32.mrf.mxu0
    %v620 = vpop.f32.mrf.mxu0
    %621 = vdwg.mxu0
    %v622 = vmax.f32 %v575, 0.0
    %v623 = vmax.f32 %v577, 0.0
    %v624 = vmax.f32 %v616, 0.0
    %v625 = vmax.f32 %v618, 0.0
    %v626 = vpack.c.bf16 %v622, %v622
    %v627 = vpack.c.bf16 %v623, %v623
    %v628 = vpack.c.bf16 %v624, %v624
    %v629 = vpack.c.bf16 %v625, %v625
    %v630 = vlaneseq
    %v631 = vshrl.u32 %v630, 7
    %v632 = vsub.s32 1, %v631
    %v633 = vrot.slane %v59, %v632
    %v666 = vunpack.c.l.b16 %v447
    %v667 = vunpack.c.h.b16 %v447
    %v668 = vunpack.c.l.b16 %v448
    %v669 = vunpack.c.h.b16 %v448
    %v670 = vunpack.c.l.b16 %v449
    %v671 = vunpack.c.h.b16 %v449
    %v672 = vunpack.c.l.b16 %v450
    %v673 = vunpack.c.h.b16 %v450
    %v674 = vunpack.c.l.b16 %v451
    %v675 = vunpack.c.h.b16 %v451
    %v676 = vunpack.c.l.b16 %v452
    %v677 = vunpack.c.h.b16 %v452
    %v678 = vunpack.c.l.b16 %v453
    %v679 = vunpack.c.h.b16 %v453
    %v680 = vunpack.c.l.b16 %v454
    %v681 = vunpack.c.h.b16 %v454
    %v682 = vunpack.c.l.b16 %v455
    %v683 = vunpack.c.h.b16 %v455
    %v684 = vunpack.c.l.b16 %v456
    %v685 = vunpack.c.h.b16 %v456
    %v686 = vunpack.c.l.b16 %v457
    %v687 = vunpack.c.h.b16 %v457
    %v688 = vunpack.c.l.b16 %v458
    %v689 = vunpack.c.h.b16 %v458
    %v690 = vunpack.c.l.b16 %v459
    %v691 = vunpack.c.h.b16 %v459
    %v692 = vunpack.c.l.b16 %v460
    %v693 = vunpack.c.h.b16 %v460
    %v694 = vunpack.c.l.b16 %v461
    %v695 = vunpack.c.h.b16 %v461
    %v696 = vunpack.c.l.b16 %v462
    %v697 = vunpack.c.h.b16 %v462
    %v698 = vunpack.c.l.b16 %v463
    %v699 = vunpack.c.h.b16 %v463
    %v700 = vunpack.c.l.b16 %v464
    %v701 = vunpack.c.h.b16 %v464
    %v702 = vunpack.c.l.b16 %v465
    %v703 = vunpack.c.h.b16 %v465
    %v704 = vunpack.c.l.b16 %v466
    %v705 = vunpack.c.h.b16 %v466
    %v706 = vunpack.c.l.b16 %v467
    %v707 = vunpack.c.h.b16 %v467
    %v708 = vunpack.c.l.b16 %v468
    %v709 = vunpack.c.h.b16 %v468
    %v710 = vunpack.c.l.b16 %v469
    %v711 = vunpack.c.h.b16 %v469
    %v712 = vunpack.c.l.b16 %v470
    %v713 = vunpack.c.h.b16 %v470
    %v714 = vunpack.c.l.b16 %v471
    %v715 = vunpack.c.h.b16 %v471
    %v716 = vunpack.c.l.b16 %v472
    %v717 = vunpack.c.h.b16 %v472
    %v718 = vunpack.c.l.b16 %v473
    %v719 = vunpack.c.h.b16 %v473
    %v720 = vunpack.c.l.b16 %v474
    %v721 = vunpack.c.h.b16 %v474
    %v722 = vunpack.c.l.b16 %v475
    %v723 = vunpack.c.h.b16 %v475
    %v724 = vunpack.c.l.b16 %v476
    %v725 = vunpack.c.h.b16 %v476
    %v726 = vunpack.c.l.b16 %v477
    %v727 = vunpack.c.h.b16 %v477
    %v728 = vunpack.c.l.b16 %v478
    %v729 = vunpack.c.h.b16 %v478
    %v730 = vpack.c.b16 %v670, %v666
    %v731 = vpack.c.b16 %v671, %v667
    %v732 = vpack.c.b16 %v672, %v668
    %v733 = vpack.c.b16 %v673, %v669
    %v734 = vpack.c.b16 %v678, %v674
    %v735 = vpack.c.b16 %v679, %v675
    %v736 = vpack.c.b16 %v680, %v676
    %v737 = vpack.c.b16 %v681, %v677
    %v738 = vpack.c.b16 %v686, %v682
    %v739 = vpack.c.b16 %v687, %v683
    %v740 = vpack.c.b16 %v688, %v684
    %v741 = vpack.c.b16 %v689, %v685
    %v742 = vpack.c.b16 %v694, %v690
    %v743 = vpack.c.b16 %v695, %v691
    %v744 = vpack.c.b16 %v696, %v692
    %v745 = vpack.c.b16 %v697, %v693
    %v746 = vpack.c.b16 %v702, %v698
    %v747 = vpack.c.b16 %v703, %v699
    %v748 = vpack.c.b16 %v704, %v700
    %v749 = vpack.c.b16 %v705, %v701
    %v750 = vpack.c.b16 %v710, %v706
    %v751 = vpack.c.b16 %v711, %v707
    %v752 = vpack.c.b16 %v712, %v708
    %v753 = vpack.c.b16 %v713, %v709
    %v754 = vpack.c.b16 %v718, %v714
    %v755 = vpack.c.b16 %v719, %v715
    %v756 = vpack.c.b16 %v720, %v716
    %v757 = vpack.c.b16 %v721, %v717
    %v758 = vpack.c.b16 %v726, %v722
    %v759 = vpack.c.b16 %v727, %v723
    %v760 = vpack.c.b16 %v728, %v724
    %v761 = vpack.c.b16 %v729, %v725
    %794 = vmatprep.subr.bf16.mxu0 %v759
    %795 = vmatpush1.bf16.xpose.msra.mxu0 %v758
    %796 = vmatprep.subr.bf16.mxu0 %v755
    %797 = vmatpush1.bf16.xpose.msra.mxu0 %v754
    %798 = vmatprep.subr.bf16.mxu0 %v751
    %799 = vmatpush1.bf16.xpose.msra.mxu0 %v750
    %800 = vmatprep.subr.bf16.mxu0 %v747
    %801 = vmatpush1.bf16.xpose.msra.mxu0 %v746
    %802 = vmatprep.subr.bf16.mxu0 %v743
    %803 = vmatpush1.bf16.xpose.msra.mxu0 %v742
    %804 = vmatprep.subr.bf16.mxu0 %v739
    %805 = vmatpush1.bf16.xpose.msra.mxu0 %v738
    %806 = vmatprep.subr.bf16.mxu0 %v735
    %807 = vmatpush1.bf16.xpose.msra.mxu0 %v734
    %808 = vmatprep.subr.bf16.mxu0 %v731
    %809 = vmatpush1.bf16.xpose.msra.mxu0 %v730
    %810 = vmatprep.subr.bf16.mxu0 0
    %811 = vmatpush2.bf16.xpose.msra.mxu0 0
    %812 = vmatprep.subr.bf16.mxu0 0
    %813 = vmatpush2.bf16.xpose.msra.mxu0 0
    %814 = vmatprep.subr.bf16.mxu0 0
    %815 = vmatpush2.bf16.xpose.msra.mxu0 0
    %816 = vmatprep.subr.bf16.mxu0 0
    %817 = vmatpush2.bf16.xpose.msra.mxu0 0
    %818 = vmatprep.subr.bf16.mxu0 0
    %819 = vmatpush2.bf16.xpose.msra.mxu0 0
    %820 = vmatprep.subr.bf16.mxu0 0
    %821 = vmatpush2.bf16.xpose.msra.mxu0 0
    %822 = vmatprep.subr.bf16.mxu0 0
    %823 = vmatpush2.bf16.xpose.msra.mxu0 0
    %824 = vmatprep.subr.bf16.mxu0 0
    %825 = vmatpush2.bf16.xpose.msra.mxu0 0
    %826 = vmatprep.mubr.bf16.mxu0 %v627
    %827 = vmatmul.mubr.bf16.gmra.mxu0 %v626
    %v828 = vpop.f32.mrf.mxu0
    %v829 = vadd.f32 %v633, %v828
    %v830 = vpop.f32.mrf.mxu0
    %v831 = vpop.f32.mrf.mxu0
    %v832 = vpop.f32.mrf.mxu0
    %833 = vdwg.mxu0
    %834 = vmatprep.subr.bf16.mxu0 %v761
    %835 = vmatpush1.bf16.xpose.msra.mxu0 %v760
    %836 = vmatprep.subr.bf16.mxu0 %v757
    %837 = vmatpush1.bf16.xpose.msra.mxu0 %v756
    %838 = vmatprep.subr.bf16.mxu0 %v753
    %839 = vmatpush1.bf16.xpose.msra.mxu0 %v752
    %840 = vmatprep.subr.bf16.mxu0 %v749
    %841 = vmatpush1.bf16.xpose.msra.mxu0 %v748
    %842 = vmatprep.subr.bf16.mxu0 %v745
    %843 = vmatpush1.bf16.xpose.msra.mxu0 %v744
    %844 = vmatprep.subr.bf16.mxu0 %v741
    %845 = vmatpush1.bf16.xpose.msra.mxu0 %v740
    %846 = vmatprep.subr.bf16.mxu0 %v737
    %847 = vmatpush1.bf16.xpose.msra.mxu0 %v736
    %848 = vmatprep.subr.bf16.mxu0 %v733
    %849 = vmatpush1.bf16.xpose.msra.mxu0 %v732
    %850 = vmatprep.subr.bf16.mxu0 0
    %851 = vmatpush2.bf16.xpose.msra.mxu0 0
    %852 = vmatprep.subr.bf16.mxu0 0
    %853 = vmatpush2.bf16.xpose.msra.mxu0 0
    %854 = vmatprep.subr.bf16.mxu0 0
    %855 = vmatpush2.bf16.xpose.msra.mxu0 0
    %856 = vmatprep.subr.bf16.mxu0 0
    %857 = vmatpush2.bf16.xpose.msra.mxu0 0
    %858 = vmatprep.subr.bf16.mxu0 0
    %859 = vmatpush2.bf16.xpose.msra.mxu0 0
    %860 = vmatprep.subr.bf16.mxu0 0
    %861 = vmatpush2.bf16.xpose.msra.mxu0 0
    %862 = vmatprep.subr.bf16.mxu0 0
    %863 = vmatpush2.bf16.xpose.msra.mxu0 0
    %864 = vmatprep.subr.bf16.mxu0 0
    %865 = vmatpush2.bf16.xpose.msra.mxu0 0
    %866 = vmatprep.mubr.bf16.mxu0 %v629
    %867 = vmatmul.mubr.bf16.gmra.mxu0 %v628
    %v868 = vpop.f32.mrf.mxu0
    %v869 = vadd.f32 %v829, %v868
    %v870 = vpop.f32.mrf.mxu0
    %v871 = vpop.f32.mrf.mxu0
    %v872 = vpop.f32.mrf.mxu0
    %873 = vdwg.mxu0
    %874 = vst [vmem:[#allocation8] sm:$0xff] %v869
    // Predicated region
    $region26: #{tpu_custom_call.1} parent=1 // pred_check
      _
    $region27: #{tpu_custom_call.1} parent=1 // pred_check_branch
      %876 = sbr.rel (0) target = $region29
    $region28: #{tpu_custom_call.1} parent=1 // pred_region
      %s878 = ssub.s32 128, 128
      %879 = vsyncadd [#allocation4], %s878
      %s881 = sshll.u32 [#allocation8], 4
      %s882 = int_to_ptr.vmem [resolvable:$true] %s881
      %884 = dma.vmem_to_hbm [thread:$0]  %s882, 128, %s3, [#allocation4]
    $region29: #{tpu_custom_call.1} parent=1 // pred_fallthru
      _
    // Predicated region
    $region30: #{tpu_custom_call.1} parent=1 // pred_check
      _
    $region31: #{tpu_custom_call.1} parent=1 // pred_check_branch
      %886 = sbr.rel (0) target = $region33
    $region32: #{tpu_custom_call.1} parent=1 // pred_region
      %887 = dma.done [#allocation4], 128
    $region33: #{tpu_custom_call.1} parent=1 // pred_fallthru
      _
    %888 = vsyncpa [#allocation3], 1
    %889 = vsyncpa [#allocation6], 1
    %890 = vsyncpa [#allocation4], 1

</llo_original>
